<compile_context>
chip_gen: v5e
topology: v5e:2x2
jax: 0.10.0
libtpu: 0.0.40
codegen_flags: <defaults>
</compile_context>

<pallas_src>
import math

import jax
import jax.numpy as jnp
from jax.experimental import pallas as pl
from jax.experimental.pallas import tpu as pltpu

_MIB = 1024 * 1024


def _round_up(n, m):
    return ((n + m - 1) // m) * m


def _vmem_capacity_bytes():
    """Physical VMEM per TensorCore (128 MiB v5e/v6e, 64 MiB v7x)."""
    try:
        cap = int(pltpu.get_tpu_info().vmem_capacity_bytes)
        if cap > 0:
            return cap
    except Exception:
        pass
    return 64 * _MIB  # conservative fallback (v7x-sized)


# ---------------------------------------------------------------------------
# Kernels
# ---------------------------------------------------------------------------
def _disc_energy_resident_kernel(x_ref, w_ref, b_ref, c_ref, o_ref):
    """One row tile, W fully VMEM-resident.

    x_ref: [tile_n, H]  row tile of x
    w_ref: [H, H]       PyTorch Linear weight (out x in), VMEM-resident
    b_ref: [1, H]       bias
    c_ref: [tile_n, H]  row tile of c
    o_ref: [tile_n, 1]  per-row energy
    """
    c = c_ref[...]
    # (c @ W): contract c's last dim with W's *first* dim -- MXU-native, no
    # transposed-RHS relayout.  f32 accumulation on the MXU.
    z = jnp.dot(c, w_ref[...], preferred_element_type=jnp.float32)
    contrib = (x_ref[...].astype(jnp.float32) * z
               + c.astype(jnp.float32) * b_ref[...].astype(jnp.float32))
    o_ref[...] = -jnp.sum(contrib, axis=-1, keepdims=True)


def _disc_energy_stream_kernel(x_ref, w_ref, b_ref, c_ref, o_ref, acc_ref):
    """Large-H path: W streams in [H, tile_k] column chunks over grid axis 1.

    x_ref:   [tile_n, tile_k]  feature chunk of the row tile of x
    w_ref:   [H, tile_k]       column chunk of W
    b_ref:   [1, H]            bias (resident)
    c_ref:   [tile_n, H]       row tile of c (resident across the k axis)
    o_ref:   [tile_n, 1]       per-row energy (written on the last k step)
    acc_ref: [tile_n, 1] f32   scratch accumulator
    """
    k = pl.program_id(1)
    c = c_ref[...]

    @pl.when(k == 0)
    def _init():
        acc_ref[...] = jnp.sum(
            c.astype(jnp.float32) * b_ref[...].astype(jnp.float32),
            axis=-1, keepdims=True)

    z = jnp.dot(c, w_ref[...], preferred_element_type=jnp.float32)
    acc_ref[...] += jnp.sum(x_ref[...].astype(jnp.float32) * z,
                            axis=-1, keepdims=True)

    @pl.when(k == pl.num_programs(1) - 1)
    def _finalize():
        o_ref[...] = -acc_ref[...]


# ---------------------------------------------------------------------------
# Tiling heuristics
# ---------------------------------------------------------------------------
def _choose_stream_tiles(n_rows, h_pad, x_it, c_it, w_it, b_it, budget):
    best = None
    for tile_k in (512, 256, 128):
        if h_pad % tile_k:
            continue
        fixed = 2 * h_pad * tile_k * w_it + 2 * h_pad * b_it   # dbl-buffered W chunk + bias
        avail = budget - fixed
        if avail <= 0:
            continue
        # per row: dbl-buffered c (resident over k) + x chunk, f32 z chunk
        # (+ fused product), accumulator, output.
        per_row = 2 * h_pad * c_it + 2 * tile_k * x_it + 8 * tile_k + 16
        tile_n = min(1024, (avail // per_row) // 128 * 128)
        if tile_n < 128:
            continue
        if best is None or tile_n > best[0]:
            best = (tile_n, tile_k)
    if best is None:
        # TODO(synk): for extreme H even a 128-row tile does not fit; would
        # need to stream c as well.  Fall back and let the compiler cope.
        best = (128, 128)
    tile_n, tile_k = best
    tile_n = max(min(tile_n, _round_up(n_rows, 8)), 8)
    return tile_n, tile_k


# ---------------------------------------------------------------------------
# Public wrapper
# ---------------------------------------------------------------------------
def disc_energy_net(x, c, weight, bias, rho=None, *,
                    force_stream=False, tile_n=None, tile_k=None):
    """sc = -((x @ weight.T + bias) * c).sum(-1)  (DiscEnergyNet.forward).

    x, c   : [..., H]  (f32 or bf16; bf16 halves HBM traffic, f32 accumulation)
    weight : [H, H]    PyTorch nn.Linear layout (out_features x in_features)
    bias   : [H]
    rho    : ignored (unused by the PyTorch forward)
    force_stream / tile_n / tile_k: testing & tuning overrides.
    """
    del rho
    orig_shape = x.shape
    H = orig_shape[-1]
    N = int(math.prod(orig_shape[:-1]))
    out_dtype = jnp.result_type(x.dtype, weight.dtype)

    x2 = x.reshape(N, H)
    c2 = c.reshape(N, H)
    w2 = weight
    b2 = bias.reshape(1, H)

    x_it, c_it = x2.dtype.itemsize, c2.dtype.itemsize
    w_it, b_it = w2.dtype.itemsize, b2.dtype.itemsize

    cap = _vmem_capacity_bytes()
    budget = (cap * 4) // 5            # ~51 MiB on v7x, ~102 MiB on v5e/v6e
    vmem_limit = (cap * 7) // 8        # ~56 MiB on v7x, ~112 MiB on v5e/v6e
    stream_threshold = (cap * 3) // 8 if cap <= 96 * _MIB else cap // 2

    # Resident-path VMEM estimate: W & bias are double-buffered by Pallas even
    # with a constant index_map -> count twice.  Per row: dbl-buffered x & c
    # tiles + ~2 f32 [*, H] intermediates + tiny output.
    fixed_res = 2 * H * H * w_it + 2 * H * b_it
    per_row_res = H * (2 * x_it + 2 * c_it + 8) + 8
    use_stream = (force_stream
                  or H * H * w_it > stream_threshold
                  or fixed_res + 128 * per_row_res > budget)

    cost = pl.CostEstimate(
        flops=2 * N * H * H + 4 * N * H,
        transcendentals=0,
        bytes_accessed=(x2.size * x_it + c2.size * c_it
                        + w2.size * w_it + b2.size * b_it + N * 4),
    )

    if not use_stream:
        if tile_n is not None:
            tn = _round_up(tile_n, 8)
        else:
            tn = 1024
            while tn > 128 and fixed_res + tn * per_row_res > budget:
                tn //= 2
            tn = max(min(tn, _round_up(N, 8)), 8)
        num_tiles = -(-N // tn)

        out = pl.pallas_call(
            _disc_energy_resident_kernel,
            out_shape=jax.ShapeDtypeStruct((num_tiles * tn, 1), jnp.float32),
            grid=(num_tiles,),
            in_specs=[
                pl.BlockSpec((tn, H), lambda i: (i, 0)),   # x row tile
                pl.BlockSpec((H, H), lambda i: (0, 0)),    # W, VMEM-resident
                pl.BlockSpec((1, H), lambda i: (0, 0)),    # bias
                pl.BlockSpec((tn, H), lambda i: (i, 0)),   # c row tile
            ],
            out_specs=pl.BlockSpec((tn, 1), lambda i: (i, 0)),
            compiler_params=pltpu.CompilerParams(
                dimension_semantics=("parallel",),
                vmem_limit_bytes=int(vmem_limit)),
            cost_estimate=cost,
        )(x2, w2, b2, c2)
    else:
        H_pad = _round_up(H, 128)
        if H_pad != H:
            # Exact zero padding along features: padded cols/rows contribute 0.
            x2 = jnp.pad(x2, ((0, 0), (0, H_pad - H)))
            c2 = jnp.pad(c2, ((0, 0), (0, H_pad - H)))
            w2 = jnp.pad(w2, ((0, H_pad - H), (0, H_pad - H)))
            b2 = jnp.pad(b2, ((0, 0), (0, H_pad - H)))

        tn, tk = _choose_stream_tiles(N, H_pad, x_it, c_it, w_it, b_it, budget)
        if tile_n is not None:
            tn = _round_up(tile_n, 8)
        if tile_k is not None:
            tk = tile_k
        assert H_pad % tk == 0, (H_pad, tk)
        num_tiles = -(-N // tn)

        out = pl.pallas_call(
            _disc_energy_stream_kernel,
            out_shape=jax.ShapeDtypeStruct((num_tiles * tn, 1), jnp.float32),
            grid=(num_tiles, H_pad // tk),
            in_specs=[
                pl.BlockSpec((tn, tk), lambda i, k: (i, k)),     # x chunk
                pl.BlockSpec((H_pad, tk), lambda i, k: (0, k)),  # W column chunk
                pl.BlockSpec((1, H_pad), lambda i, k: (0, 0)),   # bias
                pl.BlockSpec((tn, H_pad), lambda i, k: (i, 0)),  # c row tile
            ],
            out_specs=pl.BlockSpec((tn, 1), lambda i, k: (i, 0)),
            scratch_shapes=[pltpu.VMEM((tn, 1), jnp.float32)],
            compiler_params=pltpu.CompilerParams(
                dimension_semantics=("parallel", "arbitrary"),
                vmem_limit_bytes=int(vmem_limit)),
            cost_estimate=cost,
        )(x2, w2, b2, c2)

    sc = out.reshape(-1)[:N].reshape(orig_shape[:-1])
    return sc.astype(out_dtype)


# ---------------------------------------------------------------------------
# Self-test
# ---------------------------------------------------------------------------
def _init_linear_params(key, hidden):
    # Mirrors nn.Linear default init: U(-1/sqrt(H), 1/sqrt(H)).
    kw, kb = jax.random.split(key)
    bound = 1.0 / math.sqrt(hidden)
    weight = jax.random.uniform(kw, (hidden, hidden), jnp.float32, -bound, bound)
    bias = jax.random.uniform(kb, (hidden,), jnp.float32, -bound, bound)
    return weight, bias


def _reference(x, c, weight, bias):
    return -jnp.sum((jnp.einsum("...i,ji->...j", x, weight) + bias) * c, axis=-1)


if __name__ == "__main__":
    key = jax.random.PRNGKey(0)
    k1, k2, k3, k4, k5, k6 = jax.random.split(key, 6)

    # Test 1: the module's nominal small shape (resident-W path).
    batch, seq, hidden = 2, 8, 32
    x = jax.random.normal(k1, (batch, seq, hidden), jnp.float32)
    c = jax.random.normal(k2, (batch, seq, hidden), jnp.float32)
    weight, bias = _init_linear_params(k3, hidden)

    sc = jax.block_until_ready(disc_energy_net(x, c, weight, bias))
    ref = _reference(x, c, weight, bias)
    assert sc.shape == (batch, seq), sc.shape
    assert jnp.allclose(sc, ref, atol=1e-3, rtol=1e-3), float(
        jnp.max(jnp.abs(sc - ref)))

    # Test 2: streaming-W path, partial row tile (N=21, tile_n=8) and
    # multiple k chunks (H=256, tile_k=128).
    b2_, s2_, h2_ = 3, 7, 256
    x2 = jax.random.normal(k4, (b2_, s2_, h2_), jnp.float32)
    c2 = jax.random.normal(k5, (b2_, s2_, h2_), jnp.float32)
    w2_, bias2_ = _init_linear_params(k6, h2_)

    sc2 = jax.block_until_ready(
        disc_energy_net(x2, c2, w2_, bias2_, force_stream=True, tile_n=8, tile_k=128))
    ref2 = _reference(x2, c2, w2_, bias2_)
    assert sc2.shape == (b2_, s2_), sc2.shape
    assert jnp.allclose(sc2, ref2, atol=1e-3, rtol=1e-3), float(
        jnp.max(jnp.abs(sc2 - ref2)))

    print("KERNEL_OK")
</pallas_src>

<mosaic_0001>
module attributes {stable_mosaic.version = 11 : i64} {
  func.func @_disc_energy_resident_kernel(%arg0: i32, %arg1: memref<16x32xf32, #tpu.memory_space<vmem>>, %arg2: memref<32x32xf32, #tpu.memory_space<vmem>>, %arg3: memref<1x32xf32, #tpu.memory_space<vmem>>, %arg4: memref<16x32xf32, #tpu.memory_space<vmem>>, %arg5: memref<16x1xf32, #tpu.memory_space<vmem>>) attributes {dimension_semantics = [#tpu.dimension_semantics<parallel>], iteration_bounds = array<i64: 1>, scalar_prefetch = 0 : i64, scratch_operands = 0 : i64, tpu.core_type = #tpu.core_type<tc>, window_params = [{transform_indices = @transform_0, window_bounds = array<i64: 16, 32>}, {pipeline_mode = #tpu.pipeline_mode<synchronous>, transform_indices = @transform_1, window_bounds = array<i64: 32, 32>}, {pipeline_mode = #tpu.pipeline_mode<synchronous>, transform_indices = @transform_2, window_bounds = array<i64: 1, 32>}, {transform_indices = @transform_3, window_bounds = array<i64: 16, 32>}, {transform_indices = @transform_4, window_bounds = array<i64: 16, 1>}]} {
    %c0 = arith.constant 0 : index
    %c0_0 = arith.constant 0 : index
    %0 = vector.load %arg4[%c0, %c0_0] : memref<16x32xf32, #tpu.memory_space<vmem>>, vector<16x32xf32>
    %c0_1 = arith.constant 0 : index
    %c0_2 = arith.constant 0 : index
    %1 = vector.load %arg2[%c0_1, %c0_2] : memref<32x32xf32, #tpu.memory_space<vmem>>, vector<32x32xf32>
    %cst = arith.constant dense<0.000000e+00> : vector<16x32xf32>
    %2 = tpu.matmul %0, %1, %cst {dimension_numbers = #tpu.dot_dimension_numbers<[1], [0], [0], [1], [0, 0, 1, 1], [], []>} : vector<16x32xf32>, vector<32x32xf32>, vector<16x32xf32> -> vector<16x32xf32>
    %c0_3 = arith.constant 0 : index
    %c0_4 = arith.constant 0 : index
    %3 = vector.load %arg1[%c0_3, %c0_4] : memref<16x32xf32, #tpu.memory_space<vmem>>, vector<16x32xf32>
    %4 = arith.mulf %3, %2 : vector<16x32xf32>
    %c0_5 = arith.constant 0 : index
    %c0_6 = arith.constant 0 : index
    %5 = vector.load %arg3[%c0_5, %c0_6] : memref<1x32xf32, #tpu.memory_space<vmem>>, vector<1x32xf32>
    %6 = vector.broadcast %5 : vector<1x32xf32> to vector<16x32xf32>
    %7 = arith.mulf %0, %6 : vector<16x32xf32>
    %8 = arith.addf %4, %7 : vector<16x32xf32>
    %cst_7 = arith.constant dense<0.000000e+00> : vector<16xf32>
    %9 = vector.multi_reduction <add>, %8, %cst_7 [1] : vector<16x32xf32> to vector<16xf32>
    %10 = vector.shape_cast %9 : vector<16xf32> to vector<16x1xf32>
    %cst_8 = arith.constant 0.000000e+00 : f32
    %11 = vector.broadcast %cst_8 : f32 to vector<16x1xf32>
    %12 = arith.subf %11, %10 : vector<16x1xf32>
    %c0_9 = arith.constant 0 : index
    %c0_10 = arith.constant 0 : index
    %13 = vector.load %arg5[%c0_9, %c0_10] : memref<16x1xf32, #tpu.memory_space<vmem>>, vector<16x1xf32>
    tpu.vector_store %arg5[%c0_9, %c0_10], %12 {strides = array<i32>} : memref<16x1xf32, #tpu.memory_space<vmem>>, vector<16x1xf32>,
    return
  }
  func.func @transform_0(%arg0: i32) -> (i32, i32) {
    %c0_i32 = arith.constant 0 : i32
    %c0_i32_0 = arith.constant 0 : i32
    return %arg0, %c0_i32 : i32, i32
  }
  func.func @transform_1(%arg0: i32) -> (i32, i32) {
    %c0_i32 = arith.constant 0 : i32
    %c0_i32_0 = arith.constant 0 : i32
    %c0_i32_1 = arith.constant 0 : i32
    return %c0_i32, %c0_i32_0 : i32, i32
  }
  func.func @transform_2(%arg0: i32) -> (i32, i32) {
    %c0_i32 = arith.constant 0 : i32
    %c0_i32_0 = arith.constant 0 : i32
    %c0_i32_1 = arith.constant 0 : i32
    return %c0_i32, %c0_i32_0 : i32, i32
  }
  func.func @transform_3(%arg0: i32) -> (i32, i32) {
    %c0_i32 = arith.constant 0 : i32
    %c0_i32_0 = arith.constant 0 : i32
    return %arg0, %c0_i32 : i32, i32
  }
  func.func @transform_4(%arg0: i32) -> (i32, i32) {
    %c0_i32 = arith.constant 0 : i32
    %c0_i32_0 = arith.constant 0 : i32
    return %arg0, %c0_i32 : i32, i32
  }
}

</mosaic_0001>

<llo_original>
// kernel: tpu_custom_call.1
$region0: #{tpu_custom_call.1}
  #allocation0 [shape = 'u32[]', space=smem, size = 0x4, offset = 0x4, fixed_abs, tag = 'smem constant byte address 0x4 - core index']
  #allocation1 [shape = 'u32[72,128]{1,0:T(1,128)}', space=vmem, size = 0x9000, scoped, tag = 'internal scratch']
  %s0 = inlined_call_operand.hbm [shape: f32[16,32], index: 0, kind: input, shape index: {}]
  %s1 = inlined_call_operand.hbm [shape: f32[32,32], index: 1, kind: input, shape index: {}]
  %s2 = inlined_call_operand.vmem [shape: f32[1,32], index: 2, kind: input, shape index: {}]
  %s3 = inlined_call_operand.hbm [shape: f32[16,32], index: 3, kind: input, shape index: {}]
  %s4 = inlined_call_operand.vmem [shape: f32[16,1], index: 4, kind: output, shape index: {}]
  %s5 = sld [smem:[#allocation0]]
  $region38: #{tpu_custom_call.1} parent=0
    _
  %s7 = ssub.s32 1, %s5
  %s8 = scalar_select 0, %s7, %s5
  $region1: #{tpu_custom_call.1} parent=0
    #allocation2 [shape = 'u8[8192]{0}', space=vmem, size = 0x2000, scoped, tag = 'input window, operand 0, single buffered']
    #allocation3 [shape = 's32[1]{0}', space=sflag, size = 0x4, scoped, tag = 'scoped memory for tpu_custom_call.1']
    #allocation4 [shape = 'u8[16384]{0}', space=vmem, size = 0x4000, scoped, tag = 'input window, operand 1, single buffered']
    #allocation5 [shape = 's32[1]{0}', space=sflag, size = 0x4, scoped, tag = 'scoped memory for tpu_custom_call.1']
    #allocation6 [shape = 'u8[8192]{0}', space=vmem, size = 0x2000, scoped, tag = 'input window, operand 3, single buffered']
    %9 = vsyncpa [#allocation3], 0
    %10 = vsyncpa [#allocation5], 0
    // Predicated region
    $region2: #{tpu_custom_call.1} parent=1 // pred_check
      _
    $region3: #{tpu_custom_call.1} parent=1 // pred_check_branch
      %12 = sbr.rel (0) target = $region5
    $region4: #{tpu_custom_call.1} parent=1 // pred_region
      %14 = vsyncadd [#allocation3], 0
      %s15 = sshll.u32 %s0, 4
      %s16 = int_to_ptr.hbm [resolvable:$true] %s15
      %s17 = sshll.u32 [#allocation2], 4
      %s18 = int_to_ptr.vmem [resolvable:$true] %s17
      %23 = dma.hbm_to_vmem [thread:$0]  %s16, 256, %s18, [#allocation3], 128, 128, 8
    $region5: #{tpu_custom_call.1} parent=1 // pred_fallthru
      _
    // Predicated region
    $region6: #{tpu_custom_call.1} parent=1 // pred_check
      _
    $region7: #{tpu_custom_call.1} parent=1 // pred_check_branch
      %25 = sbr.rel (0) target = $region9
    $region8: #{tpu_custom_call.1} parent=1 // pred_region
      %27 = vsyncadd [#allocation5], 0
      %s28 = sshll.u32 %s1, 4
      %s29 = int_to_ptr.hbm [resolvable:$true] %s28
      %s30 = sshll.u32 [#allocation4], 4
      %s31 = int_to_ptr.vmem [resolvable:$true] %s30
      %36 = dma.hbm_to_vmem [thread:$0]  %s29, 512, %s31, [#allocation5], 128, 128, 8
    $region9: #{tpu_custom_call.1} parent=1 // pred_fallthru
      _
    // Predicated region
    $region10: #{tpu_custom_call.1} parent=1 // pred_check
      _
    $region11: #{tpu_custom_call.1} parent=1 // pred_check_branch
      %38 = sbr.rel (0) target = $region13
    $region12: #{tpu_custom_call.1} parent=1 // pred_region
      _
    $region13: #{tpu_custom_call.1} parent=1 // pred_fallthru
      _
    // Predicated region
    $region14: #{tpu_custom_call.1} parent=1 // pred_check
      _
    $region15: #{tpu_custom_call.1} parent=1 // pred_check_branch
      %40 = sbr.rel (0) target = $region17
    $region16: #{tpu_custom_call.1} parent=1 // pred_region
      %42 = vsyncadd [#allocation5], 0
      %s43 = sshll.u32 %s3, 4
      %s44 = int_to_ptr.hbm [resolvable:$true] %s43
      %s45 = sshll.u32 [#allocation6], 4
      %s46 = int_to_ptr.vmem [resolvable:$true] %s45
      %51 = dma.hbm_to_vmem [thread:$0]  %s44, 256, %s46, [#allocation5], 128, 128, 8
    $region17: #{tpu_custom_call.1} parent=1 // pred_fallthru
      _
    // Predicated region
    $region18: #{tpu_custom_call.1} parent=1 // pred_check
      _
    $region19: #{tpu_custom_call.1} parent=1 // pred_check_branch
      %53 = sbr.rel (0) target = $region21
    $region20: #{tpu_custom_call.1} parent=1 // pred_region
      %55 = dma.done [#allocation3], 256
    $region21: #{tpu_custom_call.1} parent=1 // pred_fallthru
      _
    // Predicated region
    $region22: #{tpu_custom_call.1} parent=1 // pred_check
      _
    $region23: #{tpu_custom_call.1} parent=1 // pred_check_branch
      %57 = sbr.rel (0) target = $region25
    $region24: #{tpu_custom_call.1} parent=1 // pred_region
      %59 = dma.done [#allocation5], 512
    $region25: #{tpu_custom_call.1} parent=1 // pred_fallthru
      _
    // Predicated region
    $region26: #{tpu_custom_call.1} parent=1 // pred_check
      _
    $region27: #{tpu_custom_call.1} parent=1 // pred_check_branch
      %61 = sbr.rel (0) target = $region29
    $region28: #{tpu_custom_call.1} parent=1 // pred_region
      %63 = dma.done [#allocation5], 256
    $region29: #{tpu_custom_call.1} parent=1 // pred_fallthru
      _
    %v64 = vld [vmem:[#allocation6] sm:$0xff]
    %v65 = vld [vmem:[#allocation6 + $0x8] sm:$0xff]
    %v66 = vld [vmem:[#allocation4] sm:$0xff]
    %v67 = vld [vmem:[#allocation4 + $0x8] sm:$0xff]
    %v68 = vld [vmem:[#allocation4 + $0x10] sm:$0xff]
    %v69 = vld [vmem:[#allocation4 + $0x18] sm:$0xff]
    %vm70 = vcmask 261120
    %v72 = vsel %vm70, %v64, 0
    %v75 = vsel %vm70, %v65, 0
    %77 = vmatpush.msra.mxu0 0.0
    %78 = vmatpush.msra.mxu0 0.0
    %79 = vmatpush.msra.mxu0 0.0
    %80 = vmatpush.msra.mxu0 0.0
    %81 = vmatpush.msra.mxu0 0.0
    %82 = vmatpush.msra.mxu0 0.0
    %83 = vmatpush.msra.mxu0 0.0
    %84 = vmatpush.msra.mxu0 0.0
    %85 = vmatpush.msra.mxu0 0.0
    %86 = vmatpush.msra.mxu0 0.0
    %87 = vmatpush.msra.mxu0 0.0
    %88 = vmatpush.msra.mxu0 0.0
    %89 = vmatpush.msra.mxu0 %v69
    %90 = vmatpush.msra.mxu0 %v68
    %91 = vmatpush.msra.mxu0 %v67
    %92 = vmatpush.msra.mxu0 %v66
    %93 = vmatmul.f32.gmra.mxu0 %v72
    %v94 = vpop.f32.mrf.mxu0
    %v95 = vadd.f32 0.0, %v94
    %96 = vmatmul.f32.gmra.mxu0 %v75
    %v97 = vpop.f32.mrf.mxu0
    %v98 = vadd.f32 0.0, %v97
    %99 = vdwg.mxu0
    %v100 = vld [vmem:[#allocation2] sm:$0xff]
    %v101 = vld [vmem:[#allocation2 + $0x8] sm:$0xff]
    %v102 = vmul.f32 %v100, %v95
    %v103 = vmul.f32 %v101, %v98
    %v104 = vld [vmem:[%s2] sm:$0x1]
    %v106 = vperm.slane %v104, 0
    %v108 = vmul.f32 %v64, %v106
    %v109 = vmul.f32 %v65, %v106
    %v110 = vadd.f32 %v102, %v108
    %v111 = vadd.f32 %v103, %v109
    %v112 = vsel %vm70, %v110, 0.0
    %113 = vadd.xlane.f32.xlu0 %v112
    %v114 = vpop.xlane.xlu0 %113
    %v115 = vsel %vm70, %v111, 0.0
    %116 = vadd.xlane.f32.xlu0 %v115
    %v117 = vpop.xlane.xlu0 %116
    %v118 = vsub.f32 0.0, %v114
    %v119 = vsub.f32 0.0, %v117
    %vm120 = vcmask 7168
    %121 = vst.msk [vmem:[%s4] sm:$0xff] %vm120, %v118
    %122 = vst.msk [vmem:[%s4 + $0x8] sm:$0xff] %vm120, %v119
    // Predicated region
    $region30: #{tpu_custom_call.1} parent=1 // pred_check
      _
    $region31: #{tpu_custom_call.1} parent=1 // pred_check_branch
      %124 = sbr.rel (0) target = $region33
    $region32: #{tpu_custom_call.1} parent=1 // pred_region
      _
    $region33: #{tpu_custom_call.1} parent=1 // pred_fallthru
      _
    // Predicated region
    $region34: #{tpu_custom_call.1} parent=1 // pred_check
      _
    $region35: #{tpu_custom_call.1} parent=1 // pred_check_branch
      %126 = sbr.rel (0) target = $region37
    $region36: #{tpu_custom_call.1} parent=1 // pred_region
      _
    $region37: #{tpu_custom_call.1} parent=1 // pred_fallthru
      _
    %127 = vsyncpa [#allocation3], 1
    %128 = vsyncpa [#allocation5], 1

</llo_original>
